<compile_context>
chip_gen: v7x
topology: tpu7x:2x2x1
jax: 0.10.0
libtpu: 0.0.40
codegen_flags: <defaults>
</compile_context>

<pallas_src>
import functools

import jax
import jax.numpy as jnp
from jax.experimental import pallas as pl
from jax.experimental.pallas import tpu as pltpu


# Finite stand-in for -inf: keeps the online softmax NaN-free even when a whole
# chunk of a row is masked (exp(-1e30 - m) underflows to 0 for any real m).
_MASK_VALUE = -1e30


def _vmem_limit_bytes():
    """~80% of physical VMEM (~51 MiB v7x, ~102 MiB v5e/v6e); safe fallback."""
    try:
        cap = getattr(pltpu.get_tpu_info(), "vmem_capacity_bytes", None)
        if cap:
            return int(cap) * 4 // 5
    except Exception:
        pass
    return 48 * 1024 * 1024


def _pick_row_block(batch_size, target=256):
    """MXU-friendly row block (<= target, multiple of 16) with small tail padding."""
    cands = [c for c in (target, 128, 64, 32, 16) if c <= batch_size]
    if not cands:
        return 8                               # tiny batches: single 8-row block

    def padded(c):
        return -(-batch_size // c) * c

    for c in cands:                            # largest first; accept <=12.5% padding
        if padded(c) * 8 <= batch_size * 9:
            return c
    return min(cands, key=lambda c: (padded(c), -c))


def _prep_kernel(zjs_ref, zis_ref, out_ref, *, valid_rows, row_block, use_cosine,
                 out_dtype):
    """Normalize (cosine) / cast one row block of each half; zero tail-padding rows."""
    row0 = pl.multiple_of(pl.program_id(0) * row_block, row_block)
    ridx = row0 + jax.lax.broadcasted_iota(jnp.int32, (row_block, 1), 0)
    valid = ridx < valid_rows

    def _norm(x):
        x = x.astype(jnp.float32)
        if use_cosine:
            # torch clamps ||x||*||y|| at 1e-8; per-row clamp of ||x|| at 1e-8 is
            # identical for non-degenerate inputs.
            inv_norm = jax.lax.rsqrt(
                jnp.maximum(jnp.sum(x * x, axis=-1, keepdims=True), 1e-16))
            x = x * inv_norm
        # Zero out tail-padding rows (also scrubs any OOB garbage from the
        # partial input block of a ragged batch).
        return jnp.where(valid, x, 0.0).astype(out_dtype)

    out_ref[0] = _norm(zjs_ref[...])   # rows [0, B_pad)        <- zjs  (torch.cat order)
    out_ref[1] = _norm(zis_ref[...])   # rows [B_pad, 2*B_pad)  <- zis


def _loss_kernel(q_ref, k_ref, p_ref, out_ref, m_sc, s_sc, pos_sc, q_sc, *,
                 batch_size, half_pad, row_block, col_block, inv_temperature):
    """One (row block, key chunk) step of the online-softmax NT-Xent loss."""
    i = pl.program_id(0)
    j = pl.program_id(1)
    nj = pl.num_programs(1)
    tm, tn = row_block, col_block
    row_off = pl.multiple_of(i * tm, tm)
    col_off = pl.multiple_of(j * tn, tn)
    inv_t = jnp.float32(inv_temperature)

    @pl.when(j == 0)
    def _init():
        # Fold the temperature into the query block once per row block; the same
        # bf16 operand feeds both the MXU logits and the positive dot so the
        # positive is numerically consistent with the denominator terms.
        q_sc[...] = (q_ref[...].astype(jnp.float32) * inv_t).astype(q_sc.dtype)
        pos_sc[...] = jnp.sum(
            q_sc[...].astype(jnp.float32) * p_ref[...].astype(jnp.float32),
            axis=-1, keepdims=True)
        m_sc[...] = jnp.full_like(m_sc, _MASK_VALUE)
        s_sc[...] = jnp.zeros_like(s_sc)

    # (TM, TN) logits chunk: contraction over the last dims of both operands ->
    # no transpose pass through the XLU; f32 accumulation on the MXU.
    logits = jax.lax.dot_general(
        q_sc[...], k_ref[...],
        dimension_numbers=(((1,), (1,)), ((), ())),
        preferred_element_type=jnp.float32)

    # Mask the self column and any padded (or out-of-range tail-chunk) columns.
    rows = row_off + jax.lax.broadcasted_iota(jnp.int32, (tm, tn), 0)
    cols = col_off + jax.lax.broadcasted_iota(jnp.int32, (tm, tn), 1)
    col_in_half = jnp.where(cols < half_pad, cols, cols - half_pad)
    keep = (cols != rows) & (col_in_half < batch_size)
    logits = jnp.where(keep, logits, _MASK_VALUE)

    # Online softmax across key chunks (running max / sum-exp in VMEM scratch).
    m_prev = m_sc[...]
    m_new = jnp.maximum(m_prev, jnp.max(logits, axis=-1, keepdims=True))
    alpha = jnp.exp(m_prev - m_new)
    s_sc[...] = alpha * s_sc[...] + jnp.sum(jnp.exp(logits - m_new),
                                            axis=-1, keepdims=True)
    m_sc[...] = m_new

    @pl.when(j == nj - 1)
    def _finish():
        lse = m_sc[...] + jnp.log(s_sc[...])
        ridx = row_off + jax.lax.broadcasted_iota(jnp.int32, (tm, 1), 0)
        row_in_half = jnp.where(ridx < half_pad, ridx, ridx - half_pad)
        row_valid = row_in_half < batch_size
        out_ref[...] = jnp.where(row_valid, lse - pos_sc[...], 0.0)


def nt_xent_loss(zis, zjs, *, batch_size, temperature, use_cosine_similarity=True,
                 row_block=256, col_block=512, compute_dtype=jnp.bfloat16):
    """zis, zjs: (batch_size, hidden). Returns the scalar NT-Xent loss (f32)."""
    B, D = zis.shape
    assert zjs.shape == (B, D) and B == batch_size

    tm = _pick_row_block(B, row_block)
    if tm > B:  # only possible for very small batches (< 8 rows): pad inputs once
        zjs = jnp.pad(zjs, ((0, tm - B), (0, 0)))
        zis = jnp.pad(zis, ((0, tm - B), (0, 0)))

    b_pad = pl.cdiv(B, tm) * tm            # rows per half, padded to the row block
    n_pad = 2 * b_pad
    nbh = b_pad // tm                      # row blocks per half
    tn = min(col_block, n_pad)             # key-chunk width (512 = multiple of 256/128)
    vmem_limit = _vmem_limit_bytes()

    # Pass 1: normalize / cast / pad row blocks of both halves into one slab.
    prep = pl.pallas_call(
        functools.partial(_prep_kernel, valid_rows=B, row_block=tm,
                          use_cosine=bool(use_cosine_similarity),
                          out_dtype=compute_dtype),
        out_shape=jax.ShapeDtypeStruct((2, b_pad, D), compute_dtype),
        grid=(b_pad // tm,),
        in_specs=[pl.BlockSpec((tm, D), lambda i: (i, 0)),
                  pl.BlockSpec((tm, D), lambda i: (i, 0))],
        out_specs=pl.BlockSpec((2, tm, D), lambda i: (0, i, 0)),
        compiler_params=pltpu.CompilerParams(
            dimension_semantics=("parallel",),
            vmem_limit_bytes=vmem_limit),
    )(zjs, zis)
    reps = prep.reshape(n_pad, D)          # contiguous: [zjs_hat ; pad ; zis_hat ; pad]

    # Pass 2: column-blocked online-softmax loss.  `reps` enters three times:
    # query block (constant over j -> fetched once per i), streamed key chunks
    # (double-buffered by the pipeline), and the contiguous partner block used
    # for the positive logit.  Row axis parallel, key axis arbitrary (reduction).
    per_row = pl.pallas_call(
        functools.partial(_loss_kernel, batch_size=B, half_pad=b_pad,
                          row_block=tm, col_block=tn,
                          inv_temperature=1.0 / float(temperature)),
        out_shape=jax.ShapeDtypeStruct((n_pad, 1), jnp.float32),
        grid=(n_pad // tm, pl.cdiv(n_pad, tn)),
        in_specs=[
            pl.BlockSpec((tm, D), lambda i, j: (i, 0)),                      # queries
            pl.BlockSpec((tn, D), lambda i, j: (j, 0)),                      # keys
            pl.BlockSpec((tm, D), lambda i, j: ((i + nbh) % (2 * nbh), 0)),  # partner
        ],
        out_specs=pl.BlockSpec((tm, 1), lambda i, j: (i, 0)),
        scratch_shapes=[pltpu.VMEM((tm, 1), jnp.float32),    # running max
                        pltpu.VMEM((tm, 1), jnp.float32),    # running sum-exp
                        pltpu.VMEM((tm, 1), jnp.float32),    # positive logit
                        pltpu.VMEM((tm, D), compute_dtype)], # scaled bf16 query
        compiler_params=pltpu.CompilerParams(
            dimension_semantics=("parallel", "arbitrary"),
            vmem_limit_bytes=vmem_limit),
    )(reps, reps, reps)

    return jnp.sum(per_row) / jnp.float32(2 * B)


def _nt_xent_reference(zis, zjs, *, batch_size, temperature,
                       use_cosine_similarity=True):
    """Pure-JAX reference mirroring the PyTorch forward."""
    reps = jnp.concatenate([zjs, zis], axis=0).astype(jnp.float32)
    n = 2 * batch_size
    sim = reps @ reps.T
    if use_cosine_similarity:
        norms = jnp.sqrt(jnp.sum(reps * reps, axis=-1, keepdims=True))
        sim = sim / jnp.maximum(norms * norms.T, 1e-8)
    l_pos = jnp.diagonal(sim, offset=batch_size)
    r_pos = jnp.diagonal(sim, offset=-batch_size)
    positives = jnp.concatenate([l_pos, r_pos]).reshape(n, 1)
    eye = jnp.eye(n, dtype=bool)
    off1 = jnp.eye(n, k=batch_size, dtype=bool)
    off2 = jnp.eye(n, k=-batch_size, dtype=bool)
    keep = ~(eye | off1 | off2)
    negatives = sim[keep].reshape(n, n - 2)
    logits = jnp.concatenate([positives, negatives], axis=1) / temperature
    lse = jax.nn.logsumexp(logits, axis=-1)
    loss = jnp.sum(lse - logits[:, 0])
    return loss / n


if __name__ == "__main__":
    temperature = 0.5
    key = jax.random.PRNGKey(0)

    # Second config exercises the padded/masked tail path (B not a block multiple).
    for batch_size, hidden in ((64, 128), (50, 128)):
        kb = jax.random.fold_in(key, batch_size)
        k1, k2 = jax.random.split(kb)
        zis = jax.random.normal(k1, (batch_size, hidden), dtype=jnp.float32)
        zjs = jax.random.normal(k2, (batch_size, hidden), dtype=jnp.float32)

        for use_cos, tol in ((True, 1e-2), (False, 2e-2)):
            loss = nt_xent_loss(
                zis, zjs,
                batch_size=batch_size,
                temperature=temperature,
                use_cosine_similarity=use_cos,
            )
            loss = jax.block_until_ready(loss)
            ref = _nt_xent_reference(
                zis, zjs,
                batch_size=batch_size,
                temperature=temperature,
                use_cosine_similarity=use_cos,
            )
            assert jnp.allclose(loss, ref, rtol=tol, atol=tol), (
                batch_size, use_cos, loss, ref)

    print("KERNEL_OK")
</pallas_src>

<mosaic_0001>
module attributes {stable_mosaic.version = 11 : i64} {
  func.func @_prep_kernel(%arg0: i32, %arg1: memref<64x128xf32, #tpu.memory_space<vmem>>, %arg2: memref<64x128xf32, #tpu.memory_space<vmem>>, %arg3: memref<2x64x128xbf16, #tpu.memory_space<vmem>>) attributes {dimension_semantics = [#tpu.dimension_semantics<parallel>], iteration_bounds = array<i64: 1>, scalar_prefetch = 0 : i64, scratch_operands = 0 : i64, tpu.core_type = #tpu.core_type<tc>, window_params = [{transform_indices = @transform_0, window_bounds = array<i64: 64, 128>}, {transform_indices = @transform_1, window_bounds = array<i64: 64, 128>}, {transform_indices = @transform_2, window_bounds = array<i64: 2, 64, 128>}]} {
    %c64_i32 = arith.constant 64 : i32
    %0 = arith.muli %arg0, %c64_i32 : i32
    %1 = tpu.assume_multiple %0, 64 : i32
    %2 = tpu.iota {dimensions = array<i32: 0>} : vector<64x1xi32>
    %3 = vector.broadcast %1 : i32 to vector<64x1xi32>
    %4 = arith.addi %3, %2 : vector<64x1xi32>
    %c64_i32_0 = arith.constant 64 : i32
    %5 = vector.broadcast %c64_i32_0 : i32 to vector<64x1xi32>
    %6 = arith.cmpi slt, %4, %5 : vector<64x1xi32>
    %c0 = arith.constant 0 : index
    %c0_1 = arith.constant 0 : index
    %7 = vector.load %arg1[%c0, %c0_1] : memref<64x128xf32, #tpu.memory_space<vmem>>, vector<64x128xf32>
    %8 = arith.mulf %7, %7 : vector<64x128xf32>
    %cst = arith.constant dense<0.000000e+00> : vector<64xf32>
    %9 = vector.multi_reduction <add>, %8, %cst [1] : vector<64x128xf32> to vector<64xf32>
    %10 = vector.shape_cast %9 : vector<64xf32> to vector<64x1xf32>
    %cst_2 = arith.constant 1.000000e-16 : f32
    %11 = vector.broadcast %cst_2 : f32 to vector<64x1xf32>
    %12 = arith.maximumf %10, %11 : vector<64x1xf32>
    %13 = math.rsqrt %12 : vector<64x1xf32>
    %14 = vector.broadcast %13 : vector<64x1xf32> to vector<64x128xf32>
    %15 = arith.mulf %7, %14 : vector<64x128xf32>
    %cst_3 = arith.constant 0.000000e+00 : f32
    %16 = vector.shape_cast %6 : vector<64x1xi1> to vector<64x1xi1>
    %17 = vector.broadcast %16 : vector<64x1xi1> to vector<64x128xi1>
    %18 = vector.broadcast %cst_3 : f32 to vector<64x128xf32>
    %19 = arith.select %17, %15, %18 : vector<64x128xi1>, vector<64x128xf32>
    %20 = arith.truncf %19 : vector<64x128xf32> to vector<64x128xbf16>
    %c0_4 = arith.constant 0 : index
    %c0_5 = arith.constant 0 : index
    %c0_6 = arith.constant 0 : index
    %21 = vector.load %arg3[%c0_4, %c0_5, %c0_6] : memref<2x64x128xbf16, #tpu.memory_space<vmem>>, vector<1x64x128xbf16>
    %22 = vector.shape_cast %21 : vector<1x64x128xbf16> to vector<64x128xbf16>
    %23 = vector.shape_cast %20 : vector<64x128xbf16> to vector<1x64x128xbf16>
    tpu.vector_store %arg3[%c0_4, %c0_5, %c0_6], %23 {strides = array<i32>} : memref<2x64x128xbf16, #tpu.memory_space<vmem>>, vector<1x64x128xbf16>,
    %c0_7 = arith.constant 0 : index
    %c0_8 = arith.constant 0 : index
    %24 = vector.load %arg2[%c0_7, %c0_8] : memref<64x128xf32, #tpu.memory_space<vmem>>, vector<64x128xf32>
    %25 = arith.mulf %24, %24 : vector<64x128xf32>
    %cst_9 = arith.constant dense<0.000000e+00> : vector<64xf32>
    %26 = vector.multi_reduction <add>, %25, %cst_9 [1] : vector<64x128xf32> to vector<64xf32>
    %27 = vector.shape_cast %26 : vector<64xf32> to vector<64x1xf32>
    %cst_10 = arith.constant 1.000000e-16 : f32
    %28 = vector.broadcast %cst_10 : f32 to vector<64x1xf32>
    %29 = arith.maximumf %27, %28 : vector<64x1xf32>
    %30 = math.rsqrt %29 : vector<64x1xf32>
    %31 = vector.broadcast %30 : vector<64x1xf32> to vector<64x128xf32>
    %32 = arith.mulf %24, %31 : vector<64x128xf32>
    %cst_11 = arith.constant 0.000000e+00 : f32
    %33 = vector.shape_cast %6 : vector<64x1xi1> to vector<64x1xi1>
    %34 = vector.broadcast %33 : vector<64x1xi1> to vector<64x128xi1>
    %35 = vector.broadcast %cst_11 : f32 to vector<64x128xf32>
    %36 = arith.select %34, %32, %35 : vector<64x128xi1>, vector<64x128xf32>
    %37 = arith.truncf %36 : vector<64x128xf32> to vector<64x128xbf16>
    %c1 = arith.constant 1 : index
    %c0_12 = arith.constant 0 : index
    %c0_13 = arith.constant 0 : index
    %38 = vector.load %arg3[%c1, %c0_12, %c0_13] : memref<2x64x128xbf16, #tpu.memory_space<vmem>>, vector<1x64x128xbf16>
    %39 = vector.shape_cast %38 : vector<1x64x128xbf16> to vector<64x128xbf16>
    %40 = vector.shape_cast %37 : vector<64x128xbf16> to vector<1x64x128xbf16>
    tpu.vector_store %arg3[%c1, %c0_12, %c0_13], %40 {strides = array<i32>} : memref<2x64x128xbf16, #tpu.memory_space<vmem>>, vector<1x64x128xbf16>,
    return
  }
  func.func @transform_0(%arg0: i32) -> (i32, i32) {
    %c0_i32 = arith.constant 0 : i32
    %c0_i32_0 = arith.constant 0 : i32
    return %arg0, %c0_i32 : i32, i32
  }
  func.func @transform_1(%arg0: i32) -> (i32, i32) {
    %c0_i32 = arith.constant 0 : i32
    %c0_i32_0 = arith.constant 0 : i32
    return %arg0, %c0_i32 : i32, i32
  }
  func.func @transform_2(%arg0: i32) -> (i32, i32, i32) {
    %c0_i32 = arith.constant 0 : i32
    %c0_i32_0 = arith.constant 0 : i32
    %c0_i32_1 = arith.constant 0 : i32
    return %c0_i32, %arg0, %c0_i32_0 : i32, i32, i32
  }
}

</mosaic_0001>

<llo_original>
// kernel: tpu_custom_call.1
$region0: #{tpu_custom_call.1}
  #allocation0 [shape = 'u32[]', space=smem, size = 0x4, offset = 0x4, fixed_abs, tag = 'smem constant byte address 0x4 - core index']
  #allocation1 [shape = 'u32[144,128]{1,0:T(1,128)}', space=vmem, size = 0x12000, scoped, tag = 'internal scratch']
  %s0 = inlined_call_operand.hbm [shape: f32[64,128], index: 0, kind: input, shape index: {}]
  %s1 = inlined_call_operand.hbm [shape: f32[64,128], index: 1, kind: input, shape index: {}]
  %s2 = inlined_call_operand.hbm [shape: bf16[2,64,128], index: 2, kind: output, shape index: {}]
  %s3 = sld [smem:[#allocation0]]
  $region26: #{tpu_custom_call.1} parent=0
    _
  %s5 = ssub.s32 1, %s3
  %s6 = scalar_select 0, %s5, %s3
  $region1: #{tpu_custom_call.1} parent=0
    #allocation2 [shape = 'u8[32768]{0}', space=vmem, size = 0x8000, scoped, tag = 'input window, operand 0, single buffered']
    #allocation3 [shape = 's32[1]{0}', space=sflag, size = 0x4, scoped, tag = 'scoped memory for tpu_custom_call.1']
    #allocation4 [shape = 's32[1]{0}', space=sflag, size = 0x4, scoped, tag = 'scoped memory for tpu_custom_call.1']
    #allocation5 [shape = 'u8[32768]{0}', space=vmem, size = 0x8000, scoped, tag = 'input window, operand 1, single buffered']
    #allocation6 [shape = 's32[1]{0}', space=sflag, size = 0x4, scoped, tag = 'scoped memory for tpu_custom_call.1']
    #allocation7 [shape = 'u8[32768]{0}', space=vmem, size = 0x8000, scoped, tag = 'output window, operand 0, single buffered']
    %7 = vsyncpa [#allocation3], 0
    %8 = vsyncpa [#allocation6], 0
    %9 = vsyncpa [#allocation4], 0
    // Predicated region
    $region2: #{tpu_custom_call.1} parent=1 // pred_check
      _
    $region3: #{tpu_custom_call.1} parent=1 // pred_check_branch
      %11 = sbr.rel (0) target = $region5
    $region4: #{tpu_custom_call.1} parent=1 // pred_region
      %s13 = ssub.s32 1024, 1024
      %14 = vsyncadd [#allocation3], %s13
      %s15 = sshll.u32 [#allocation2], 4
      %s16 = int_to_ptr.vmem [resolvable:$true] %s15
      %21 = dma.hbm_to_vmem [thread:$0]  %s0, 1024, %s16, [#allocation3], 128, 128, 8
    $region5: #{tpu_custom_call.1} parent=1 // pred_fallthru
      _
    // Predicated region
    $region6: #{tpu_custom_call.1} parent=1 // pred_check
      _
    $region7: #{tpu_custom_call.1} parent=1 // pred_check_branch
      %23 = sbr.rel (0) target = $region9
    $region8: #{tpu_custom_call.1} parent=1 // pred_region
      %s25 = ssub.s32 1024, 1024
      %26 = vsyncadd [#allocation6], %s25
      %s27 = sshll.u32 [#allocation5], 4
      %s28 = int_to_ptr.vmem [resolvable:$true] %s27
      %33 = dma.hbm_to_vmem [thread:$0]  %s1, 1024, %s28, [#allocation6], 128, 128, 8
    $region9: #{tpu_custom_call.1} parent=1 // pred_fallthru
      _
    // Predicated region
    $region10: #{tpu_custom_call.1} parent=1 // pred_check
      _
    $region11: #{tpu_custom_call.1} parent=1 // pred_check_branch
      %35 = sbr.rel (0) target = $region13
    $region12: #{tpu_custom_call.1} parent=1 // pred_region
      %36 = dma.done [#allocation3], 1024
    $region13: #{tpu_custom_call.1} parent=1 // pred_fallthru
      _
    // Predicated region
    $region14: #{tpu_custom_call.1} parent=1 // pred_check
      _
    $region15: #{tpu_custom_call.1} parent=1 // pred_check_branch
      %38 = sbr.rel (0) target = $region17
    $region16: #{tpu_custom_call.1} parent=1 // pred_region
      %39 = dma.done [#allocation6], 1024
    $region17: #{tpu_custom_call.1} parent=1 // pred_fallthru
      _
    %s40 = smul.u32 0, 64
    %v41 = vlaneseq
    %v42 = vshrl.u32 %v41, 7
    %v43 = vadd.s32 %v42, 8
    %v44 = vadd.s32 %v42, 16
    %v45 = vadd.s32 %v42, 24
    %v46 = vadd.s32 %v42, 32
    %v47 = vadd.s32 %v42, 40
    %v48 = vadd.s32 %v42, 48
    %v49 = vadd.s32 %v42, 56
    %v50 = vstv %s40
    %v51 = vadd.s32 %v50, %v42
    %v52 = vadd.s32 %v50, %v43
    %v53 = vadd.s32 %v50, %v44
    %v54 = vadd.s32 %v50, %v45
    %v55 = vadd.s32 %v50, %v46
    %v56 = vadd.s32 %v50, %v47
    %v57 = vadd.s32 %v50, %v48
    %v58 = vadd.s32 %v50, %v49
    %vm59 = vcmp.lt.s32.totalorder %v51, 64
    %vm60 = vcmp.lt.s32.totalorder %v52, 64
    %vm61 = vcmp.lt.s32.totalorder %v53, 64
    %vm62 = vcmp.lt.s32.totalorder %v54, 64
    %vm63 = vcmp.lt.s32.totalorder %v55, 64
    %vm64 = vcmp.lt.s32.totalorder %v56, 64
    %vm65 = vcmp.lt.s32.totalorder %v57, 64
    %vm66 = vcmp.lt.s32.totalorder %v58, 64
    %v67 = vld [vmem:[#allocation2] sm:$0xff]
    %v68 = vld [vmem:[#allocation2 + $0x8] sm:$0xff]
    %v69 = vld [vmem:[#allocation2 + $0x10] sm:$0xff]
    %v70 = vld [vmem:[#allocation2 + $0x18] sm:$0xff]
    %v71 = vld [vmem:[#allocation2 + $0x20] sm:$0xff]
    %v72 = vld [vmem:[#allocation2 + $0x28] sm:$0xff]
    %v73 = vld [vmem:[#allocation2 + $0x30] sm:$0xff]
    %v74 = vld [vmem:[#allocation2 + $0x38] sm:$0xff]
    %v75 = vmul.f32 %v67, %v67
    %v76 = vmul.f32 %v68, %v68
    %v77 = vmul.f32 %v69, %v69
    %v78 = vmul.f32 %v70, %v70
    %v79 = vmul.f32 %v71, %v71
    %v80 = vmul.f32 %v72, %v72
    %v81 = vmul.f32 %v73, %v73
    %v82 = vmul.f32 %v74, %v74
    %83 = vadd.xlane.f32.xlu0 %v75
    %v84 = vpop.xlane.xlu0 %83
    %85 = vadd.xlane.f32.xlu0 %v76
    %v86 = vpop.xlane.xlu0 %85
    %87 = vadd.xlane.f32.xlu0 %v77
    %v88 = vpop.xlane.xlu0 %87
    %89 = vadd.xlane.f32.xlu0 %v78
    %v90 = vpop.xlane.xlu0 %89
    %91 = vadd.xlane.f32.xlu0 %v79
    %v92 = vpop.xlane.xlu0 %91
    %93 = vadd.xlane.f32.xlu0 %v80
    %v94 = vpop.xlane.xlu0 %93
    %95 = vadd.xlane.f32.xlu0 %v81
    %v96 = vpop.xlane.xlu0 %95
    %97 = vadd.xlane.f32.xlu0 %v82
    %v98 = vpop.xlane.xlu0 %97
    %v99 = vmax.f32 %v84, 1e-16
    %v100 = vmax.f32 %v86, 1e-16
    %v101 = vmax.f32 %v88, 1e-16
    %v102 = vmax.f32 %v90, 1e-16
    %v103 = vmax.f32 %v92, 1e-16
    %v104 = vmax.f32 %v94, 1e-16
    %v105 = vmax.f32 %v96, 1e-16
    %v106 = vmax.f32 %v98, 1e-16
    %v107 = vrsqrt.pop %v99
    %v108 = vrsqrt.pop %v100
    %v109 = vrsqrt.pop %v101
    %v110 = vrsqrt.pop %v102
    %v111 = vrsqrt.pop %v103
    %v112 = vrsqrt.pop %v104
    %v113 = vrsqrt.pop %v105
    %v114 = vrsqrt.pop %v106
    %v115 = vmul.f32 %v67, %v107
    %v116 = vmul.f32 %v68, %v108
    %v117 = vmul.f32 %v69, %v109
    %v118 = vmul.f32 %v70, %v110
    %v119 = vmul.f32 %v71, %v111
    %v120 = vmul.f32 %v72, %v112
    %v121 = vmul.f32 %v73, %v113
    %v122 = vmul.f32 %v74, %v114
    %v123 = vsel %vm59, 1, 0
    %v124 = vsel %vm60, 1, 0
    %v125 = vsel %vm61, 1, 0
    %v126 = vsel %vm62, 1, 0
    %v127 = vsel %vm63, 1, 0
    %v128 = vsel %vm64, 1, 0
    %v129 = vsel %vm65, 1, 0
    %v130 = vsel %vm66, 1, 0
    %vm131 = vcmp.eq.s32.totalorder %v123, 1
    %vm132 = vcmp.eq.s32.totalorder %v124, 1
    %vm133 = vcmp.eq.s32.totalorder %v125, 1
    %vm134 = vcmp.eq.s32.totalorder %v126, 1
    %vm135 = vcmp.eq.s32.totalorder %v127, 1
    %vm136 = vcmp.eq.s32.totalorder %v128, 1
    %vm137 = vcmp.eq.s32.totalorder %v129, 1
    %vm138 = vcmp.eq.s32.totalorder %v130, 1
    %v139 = vsel %vm131, %v115, 0.0
    %v140 = vsel %vm132, %v116, 0.0
    %v141 = vsel %vm133, %v117, 0.0
    %v142 = vsel %vm134, %v118, 0.0
    %v143 = vsel %vm135, %v119, 0.0
    %v144 = vsel %vm136, %v120, 0.0
    %v145 = vsel %vm137, %v121, 0.0
    %v146 = vsel %vm138, %v122, 0.0
    %v147 = vpack.c.bf16 %v140, %v139
    %v148 = vpack.c.bf16 %v142, %v141
    %v149 = vpack.c.bf16 %v144, %v143
    %v150 = vpack.c.bf16 %v146, %v145
    %v155 = vunpack.c.l.b16 %v147
    %v156 = vunpack.c.h.b16 %v147
    %v157 = vunpack.c.l.b16 %v148
    %v158 = vunpack.c.h.b16 %v148
    %v159 = vunpack.c.l.b16 %v149
    %v160 = vunpack.c.h.b16 %v149
    %v161 = vunpack.c.l.b16 %v150
    %v162 = vunpack.c.h.b16 %v150
    %v163 = vpack.c.b16 %v155, %v155
    %v164 = vpack.c.b16 %v156, %v156
    %v165 = vpack.c.b16 %v157, %v157
    %v166 = vpack.c.b16 %v158, %v158
    %v167 = vpack.c.b16 %v159, %v159
    %v168 = vpack.c.b16 %v160, %v160
    %v169 = vpack.c.b16 %v161, %v161
    %v170 = vpack.c.b16 %v162, %v162
    %179 = vst [vmem:[#allocation7] sm:$0xf] %v163
    %180 = vst [vmem:[#allocation7 + $0x4] sm:$0xf] %v164
    %181 = vst [vmem:[#allocation7 + $0x8] sm:$0xf] %v165
    %182 = vst [vmem:[#allocation7 + $0xc] sm:$0xf] %v166
    %183 = vst [vmem:[#allocation7 + $0x10] sm:$0xf] %v167
    %184 = vst [vmem:[#allocation7 + $0x14] sm:$0xf] %v168
    %185 = vst [vmem:[#allocation7 + $0x18] sm:$0xf] %v169
    %186 = vst [vmem:[#allocation7 + $0x1c] sm:$0xf] %v170
    %v187 = vld [vmem:[#allocation5] sm:$0xff]
    %v188 = vld [vmem:[#allocation5 + $0x8] sm:$0xff]
    %v189 = vld [vmem:[#allocation5 + $0x10] sm:$0xff]
    %v190 = vld [vmem:[#allocation5 + $0x18] sm:$0xff]
    %v191 = vld [vmem:[#allocation5 + $0x20] sm:$0xff]
    %v192 = vld [vmem:[#allocation5 + $0x28] sm:$0xff]
    %v193 = vld [vmem:[#allocation5 + $0x30] sm:$0xff]
    %v194 = vld [vmem:[#allocation5 + $0x38] sm:$0xff]
    %v195 = vmul.f32 %v187, %v187
    %v196 = vmul.f32 %v188, %v188
    %v197 = vmul.f32 %v189, %v189
    %v198 = vmul.f32 %v190, %v190
    %v199 = vmul.f32 %v191, %v191
    %v200 = vmul.f32 %v192, %v192
    %v201 = vmul.f32 %v193, %v193
    %v202 = vmul.f32 %v194, %v194
    %203 = vadd.xlane.f32.xlu0 %v195
    %v204 = vpop.xlane.xlu0 %203
    %205 = vadd.xlane.f32.xlu0 %v196
    %v206 = vpop.xlane.xlu0 %205
    %207 = vadd.xlane.f32.xlu0 %v197
    %v208 = vpop.xlane.xlu0 %207
    %209 = vadd.xlane.f32.xlu0 %v198
    %v210 = vpop.xlane.xlu0 %209
    %211 = vadd.xlane.f32.xlu0 %v199
    %v212 = vpop.xlane.xlu0 %211
    %213 = vadd.xlane.f32.xlu0 %v200
    %v214 = vpop.xlane.xlu0 %213
    %215 = vadd.xlane.f32.xlu0 %v201
    %v216 = vpop.xlane.xlu0 %215
    %217 = vadd.xlane.f32.xlu0 %v202
    %v218 = vpop.xlane.xlu0 %217
    %v219 = vmax.f32 %v204, 1e-16
    %v220 = vmax.f32 %v206, 1e-16
    %v221 = vmax.f32 %v208, 1e-16
    %v222 = vmax.f32 %v210, 1e-16
    %v223 = vmax.f32 %v212, 1e-16
    %v224 = vmax.f32 %v214, 1e-16
    %v225 = vmax.f32 %v216, 1e-16
    %v226 = vmax.f32 %v218, 1e-16
    %v227 = vrsqrt.pop %v219
    %v228 = vrsqrt.pop %v220
    %v229 = vrsqrt.pop %v221
    %v230 = vrsqrt.pop %v222
    %v231 = vrsqrt.pop %v223
    %v232 = vrsqrt.pop %v224
    %v233 = vrsqrt.pop %v225
    %v234 = vrsqrt.pop %v226
    %v235 = vmul.f32 %v187, %v227
    %v236 = vmul.f32 %v188, %v228
    %v237 = vmul.f32 %v189, %v229
    %v238 = vmul.f32 %v190, %v230
    %v239 = vmul.f32 %v191, %v231
    %v240 = vmul.f32 %v192, %v232
    %v241 = vmul.f32 %v193, %v233
    %v242 = vmul.f32 %v194, %v234
    %v243 = vsel %vm131, %v235, 0.0
    %v244 = vsel %vm132, %v236, 0.0
    %v245 = vsel %vm133, %v237, 0.0
    %v246 = vsel %vm134, %v238, 0.0
    %v247 = vsel %vm135, %v239, 0.0
    %v248 = vsel %vm136, %v240, 0.0
    %v249 = vsel %vm137, %v241, 0.0
    %v250 = vsel %vm138, %v242, 0.0
    %v251 = vpack.c.bf16 %v244, %v243
    %v252 = vpack.c.bf16 %v246, %v245
    %v253 = vpack.c.bf16 %v248, %v247
    %v254 = vpack.c.bf16 %v250, %v249
    %v259 = vunpack.c.l.b16 %v251
    %v260 = vunpack.c.h.b16 %v251
    %v261 = vunpack.c.l.b16 %v252
    %v262 = vunpack.c.h.b16 %v252
    %v263 = vunpack.c.l.b16 %v253
    %v264 = vunpack.c.h.b16 %v253
    %v265 = vunpack.c.l.b16 %v254
    %v266 = vunpack.c.h.b16 %v254
    %v267 = vpack.c.b16 %v259, %v259
    %v268 = vpack.c.b16 %v260, %v260
    %v269 = vpack.c.b16 %v261, %v261
    %v270 = vpack.c.b16 %v262, %v262
    %v271 = vpack.c.b16 %v263, %v263
    %v272 = vpack.c.b16 %v264, %v264
    %v273 = vpack.c.b16 %v265, %v265
    %v274 = vpack.c.b16 %v266, %v266
    %s283 = scalar_lea.vmem [#allocation7], 32
    %284 = vst [vmem:[%s283] sm:$0xf] %v267
    %285 = vst [vmem:[%s283 + $0x4] sm:$0xf] %v268
    %286 = vst [vmem:[%s283 + $0x8] sm:$0xf] %v269
    %287 = vst [vmem:[%s283 + $0xc] sm:$0xf] %v270
    %288 = vst [vmem:[%s283 + $0x10] sm:$0xf] %v271
    %289 = vst [vmem:[%s283 + $0x14] sm:$0xf] %v272
    %290 = vst [vmem:[%s283 + $0x18] sm:$0xf] %v273
    %291 = vst [vmem:[%s283 + $0x1c] sm:$0xf] %v274
    // Predicated region
    $region18: #{tpu_custom_call.1} parent=1 // pred_check
      _
    $region19: #{tpu_custom_call.1} parent=1 // pred_check_branch
      %293 = sbr.rel (0) target = $region21
    $region20: #{tpu_custom_call.1} parent=1 // pred_region
      %s295 = ssub.s32 1024, 1024
      %296 = vsyncadd [#allocation4], %s295
      %s297 = sshll.u32 [#allocation7], 4
      %s298 = int_to_ptr.vmem [resolvable:$true] %s297
      %303 = dma.vmem_to_hbm [thread:$0]  %s298, 1024, %s2, [#allocation4], 64, 64, 4
    $region21: #{tpu_custom_call.1} parent=1 // pred_fallthru
      _
    // Predicated region
    $region22: #{tpu_custom_call.1} parent=1 // pred_check
      _
    $region23: #{tpu_custom_call.1} parent=1 // pred_check_branch
      %305 = sbr.rel (0) target = $region25
    $region24: #{tpu_custom_call.1} parent=1 // pred_region
      %306 = dma.done [#allocation4], 1024
    $region25: #{tpu_custom_call.1} parent=1 // pred_fallthru
      _
    %307 = vsyncpa [#allocation3], 1
    %308 = vsyncpa [#allocation6], 1
    %309 = vsyncpa [#allocation4], 1

</llo_original>
